<compile_context>
chip_gen: v7x
topology: tpu7x:2x2x1
jax: 0.10.0
libtpu: 0.0.40
codegen_flags: <defaults>
</compile_context>

<pallas_src>
import functools

import jax
import jax.numpy as jnp
from jax.experimental import pallas as pl
from jax.experimental.pallas import tpu as pltpu


# ---------------------------------------------------------------------------
# Slab layout: each parameter section starts on an 8-row (sublane) boundary,
# lane width padded to 128 so every load is lane-aligned.
# ---------------------------------------------------------------------------
def _round_up(x, m=8):
    return ((x + m - 1) // m) * m


def _slab_layout(obs_dim, act_dim, hidden_dim):
    h2 = 2 * hidden_dim
    o_w1s = 0
    o_w1a = _round_up(o_w1s + obs_dim)
    o_b1 = _round_up(o_w1a + act_dim)
    o_w2 = _round_up(o_b1 + 1)
    o_b2 = _round_up(o_w2 + h2)
    o_w3 = _round_up(o_b2 + 1)
    o_b3 = _round_up(o_w3 + h2)
    rows = _round_up(o_b3 + 1)
    cols = max(128, _round_up(max(h2, obs_dim), 128))
    return dict(w1s=o_w1s, w1a=o_w1a, b1=o_b1, w2=o_w2, b2=o_b2,
                w3=o_w3, b3=o_b3, rows=rows, cols=cols)


def pack_transition_params(params_t1, params_t2, obs_dim, act_dim, hidden_dim):
    """Fuse the two transition_net parameter sets into one padded VMEM slab."""
    w1a_, b1a_, w2a_, b2a_, w3a_, b3a_ = params_t1
    w1b_, b1b_, w2b_, b2b_, w3b_, b3b_ = params_t2
    h = hidden_dim
    h2 = 2 * h
    lay = _slab_layout(obs_dim, act_dim, hidden_dim)

    w1s = jnp.concatenate([w1a_[:obs_dim], w1b_[:obs_dim]], axis=1)       # [obs, 2H]
    w1act = jnp.concatenate([w1a_[obs_dim:], w1b_[obs_dim:]], axis=1)     # [act, 2H]
    b1 = jnp.concatenate([b1a_, b1b_], axis=1)                            # [1, 2H]
    w2 = jnp.zeros((h2, h2), jnp.float32)
    w2 = w2.at[:h, :h].set(w2a_).at[h:, h:].set(w2b_)                     # blockdiag
    b2 = jnp.concatenate([b2a_, b2b_], axis=1)                            # [1, 2H]
    w3 = jnp.concatenate([w3a_, w3b_], axis=0)                            # [2H, obs]
    b3 = b3a_ + b3b_                                                      # [1, obs]

    slab = jnp.zeros((lay["rows"], lay["cols"]), jnp.float32)
    slab = slab.at[lay["w1s"]:lay["w1s"] + obs_dim, :h2].set(w1s)
    slab = slab.at[lay["w1a"]:lay["w1a"] + act_dim, :h2].set(w1act)
    slab = slab.at[lay["b1"]:lay["b1"] + 1, :h2].set(b1)
    slab = slab.at[lay["w2"]:lay["w2"] + h2, :h2].set(w2)
    slab = slab.at[lay["b2"]:lay["b2"] + 1, :h2].set(b2)
    slab = slab.at[lay["w3"]:lay["w3"] + h2, :obs_dim].set(w3)
    slab = slab.at[lay["b3"]:lay["b3"] + 1, :obs_dim].set(b3)
    return slab


# ---------------------------------------------------------------------------
# Fused kernel: 3 matmuls on the MXU, bias + LeakyReLU on the VPU,
# final 0.5 * (h2 @ W3 + b3) written directly to out_ref.
# ---------------------------------------------------------------------------
def _leaky_relu(x, negative_slope=0.01):
    return jnp.where(x > 0, x, negative_slope * x)


def _fused_kernel(state_ref, action_ref, p_ref, out_ref, *,
                  lay, obs_dim, act_dim, hidden_dim):
    h2 = 2 * hidden_dim
    s = state_ref[...]                                             # [B, obs]
    a = action_ref[...]                                            # [B, act]

    w1s = p_ref[lay["w1s"]:lay["w1s"] + obs_dim, :h2]              # [obs, 2H]
    w1a = p_ref[lay["w1a"]:lay["w1a"] + act_dim, :h2]              # [act, 2H]
    b1 = p_ref[lay["b1"]:lay["b1"] + 1, :h2]                       # [1, 2H]
    w2 = p_ref[lay["w2"]:lay["w2"] + h2, :h2]                      # [2H, 2H]
    b2 = p_ref[lay["b2"]:lay["b2"] + 1, :h2]                       # [1, 2H]
    w3 = p_ref[lay["w3"]:lay["w3"] + h2, :obs_dim]                 # [2H, obs]
    b3 = p_ref[lay["b3"]:lay["b3"] + 1, :obs_dim]                  # [1, obs]

    # h1 = leaky([state, action] @ W1 + b1) without materializing the concat.
    h1 = _leaky_relu(
        jnp.dot(s, w1s, preferred_element_type=jnp.float32)
        + jnp.dot(a, w1a, preferred_element_type=jnp.float32)
        + b1)
    h2_act = _leaky_relu(
        jnp.dot(h1, w2, preferred_element_type=jnp.float32) + b2)
    # vstacked W3 + summed b3 give ns1 + ns2 in one matmul; just halve it.
    out_ref[...] = (
        (jnp.dot(h2_act, w3, preferred_element_type=jnp.float32) + b3) * 0.5
    ).astype(out_ref.dtype)


def make_transition_nets_forward(obs_dim, act_dim, hidden_dim):
    """Returns a jitted forward(state, action, param_slab) -> [B, obs]."""
    lay = _slab_layout(obs_dim, act_dim, hidden_dim)
    kernel = functools.partial(_fused_kernel, lay=lay, obs_dim=obs_dim,
                               act_dim=act_dim, hidden_dim=hidden_dim)
    h2 = 2 * hidden_dim
    in_dim = obs_dim + act_dim

    @jax.jit
    def forward(state, action, param_slab):
        batch = state.shape[0]
        flops = 2 * batch * (in_dim * h2 + h2 * h2 + h2 * obs_dim)
        bytes_accessed = 4 * (state.size + action.size + param_slab.size
                              + batch * obs_dim)
        # TODO(synk): for very large batches, add a batch grid
        # (dimension_semantics=("parallel",)) so v7x's two TensorCores split
        # the rows; at the sizes this module is used with, gridless is best.
        return pl.pallas_call(
            kernel,
            out_shape=jax.ShapeDtypeStruct((batch, obs_dim), jnp.float32),
            in_specs=[pl.BlockSpec(memory_space=pltpu.MemorySpace.VMEM)] * 3,
            out_specs=pl.BlockSpec(memory_space=pltpu.MemorySpace.VMEM),
            cost_estimate=pl.CostEstimate(flops=flops, transcendentals=0,
                                          bytes_accessed=bytes_accessed),
        )(state, action, param_slab)

    return forward


# ---------------------------------------------------------------------------
# Deterministic parameter construction (mirrors transition_net.__init__ +
# weight_init: orthogonal Linear weights, zero biases).  Weights stored
# [in, out] (transpose of torch's [out, in]); biases [1, out].
# ---------------------------------------------------------------------------
def make_transition_net_params(key, in_dim, hidden_dim, out_dim):
    k1, k2, k3 = jax.random.split(key, 3)
    ortho = jax.nn.initializers.orthogonal()
    w1 = ortho(k1, (in_dim, hidden_dim), jnp.float32)
    b1 = jnp.zeros((1, hidden_dim), jnp.float32)
    w2 = ortho(k2, (hidden_dim, hidden_dim), jnp.float32)
    b2 = jnp.zeros((1, hidden_dim), jnp.float32)
    w3 = ortho(k3, (hidden_dim, out_dim), jnp.float32)
    b3 = jnp.zeros((1, out_dim), jnp.float32)
    return (w1, b1, w2, b2, w3, b3)


def reference_forward(state, action, params_t1, params_t2):
    x = jnp.concatenate([state, action], axis=1)

    def mlp(x, p):
        w1, b1, w2, b2, w3, b3 = p
        h1 = jax.nn.leaky_relu(x @ w1 + b1, 0.01)
        h2 = jax.nn.leaky_relu(h1 @ w2 + b2, 0.01)
        return h2 @ w3 + b3

    return (mlp(x, params_t1) + mlp(x, params_t2)) / 2.0


if __name__ == "__main__":
    # Small, module-consistent shapes: obs_dim=16, act_dim=4, hidden=32, batch=8
    batch, obs_dim, act_dim, hidden_dim = 8, 16, 4, 32
    in_dim = obs_dim + act_dim

    key = jax.random.PRNGKey(0)
    k_state, k_action, k_t1, k_t2 = jax.random.split(key, 4)

    state = jax.random.normal(k_state, (batch, obs_dim), jnp.float32)
    action = jax.random.normal(k_action, (batch, act_dim), jnp.float32)

    params_t1 = make_transition_net_params(k_t1, in_dim, hidden_dim, obs_dim)
    params_t2 = make_transition_net_params(k_t2, in_dim, hidden_dim, obs_dim)

    # One-time host-side parameter fusion/packing.
    param_slab = pack_transition_params(params_t1, params_t2,
                                        obs_dim, act_dim, hidden_dim)
    forward = make_transition_nets_forward(obs_dim, act_dim, hidden_dim)

    out = jax.block_until_ready(forward(state, action, param_slab))

    ref = reference_forward(state, action, params_t1, params_t2)
    assert out.shape == (batch, obs_dim)
    assert jnp.allclose(out, ref, atol=1e-4, rtol=1e-4), "mismatch vs reference"

    print("KERNEL_OK")
</pallas_src>

<mosaic_0001>
module attributes {stable_mosaic.version = 11 : i64} {
  func.func @_fused_kernel(%arg0: memref<8x16xf32, #tpu.memory_space<vmem>>, %arg1: memref<8x4xf32, #tpu.memory_space<vmem>>, %arg2: memref<176x128xf32, #tpu.memory_space<vmem>>, %arg3: memref<8x16xf32, #tpu.memory_space<vmem>>) attributes {dimension_semantics = [], scalar_prefetch = 0 : i64, scratch_operands = 0 : i64, tpu.core_type = #tpu.core_type<tc>} {
    %c0 = arith.constant 0 : index
    %c0_0 = arith.constant 0 : index
    %0 = vector.load %arg0[%c0, %c0_0] : memref<8x16xf32, #tpu.memory_space<vmem>>, vector<8x16xf32>
    %c0_1 = arith.constant 0 : index
    %c0_2 = arith.constant 0 : index
    %1 = vector.load %arg1[%c0_1, %c0_2] : memref<8x4xf32, #tpu.memory_space<vmem>>, vector<8x4xf32>
    %c0_3 = arith.constant 0 : index
    %c0_4 = arith.constant 0 : index
    %2 = vector.load %arg2[%c0_3, %c0_4] : memref<176x128xf32, #tpu.memory_space<vmem>>, vector<16x64xf32>
    %c16 = arith.constant 16 : index
    %c0_5 = arith.constant 0 : index
    %3 = vector.load %arg2[%c16, %c0_5] : memref<176x128xf32, #tpu.memory_space<vmem>>, vector<4x64xf32>
    %c24 = arith.constant 24 : index
    %c0_6 = arith.constant 0 : index
    %4 = vector.load %arg2[%c24, %c0_6] : memref<176x128xf32, #tpu.memory_space<vmem>>, vector<1x64xf32>
    %c32 = arith.constant 32 : index
    %c0_7 = arith.constant 0 : index
    %5 = vector.load %arg2[%c32, %c0_7] : memref<176x128xf32, #tpu.memory_space<vmem>>, vector<64x64xf32>
    %c96 = arith.constant 96 : index
    %c0_8 = arith.constant 0 : index
    %6 = vector.load %arg2[%c96, %c0_8] : memref<176x128xf32, #tpu.memory_space<vmem>>, vector<1x64xf32>
    %c104 = arith.constant 104 : index
    %c0_9 = arith.constant 0 : index
    %7 = vector.load %arg2[%c104, %c0_9] : memref<176x128xf32, #tpu.memory_space<vmem>>, vector<64x16xf32>
    %c168 = arith.constant 168 : index
    %c0_10 = arith.constant 0 : index
    %8 = vector.load %arg2[%c168, %c0_10] : memref<176x128xf32, #tpu.memory_space<vmem>>, vector<1x16xf32>
    %cst = arith.constant dense<0.000000e+00> : vector<8x64xf32>
    %9 = tpu.matmul %0, %2, %cst {dimension_numbers = #tpu.dot_dimension_numbers<[1], [0], [0], [1], [0, 0, 1, 1], [], []>} : vector<8x16xf32>, vector<16x64xf32>, vector<8x64xf32> -> vector<8x64xf32>
    %cst_11 = arith.constant dense<0.000000e+00> : vector<8x64xf32>
    %10 = tpu.matmul %1, %3, %cst_11 {dimension_numbers = #tpu.dot_dimension_numbers<[1], [0], [0], [1], [0, 0, 1, 1], [], []>} : vector<8x4xf32>, vector<4x64xf32>, vector<8x64xf32> -> vector<8x64xf32>
    %11 = arith.addf %9, %10 : vector<8x64xf32>
    %12 = vector.broadcast %4 : vector<1x64xf32> to vector<8x64xf32>
    %13 = arith.addf %11, %12 : vector<8x64xf32>
    %cst_12 = arith.constant 0.000000e+00 : f32
    %14 = vector.broadcast %cst_12 : f32 to vector<8x64xf32>
    %15 = arith.cmpf ogt, %13, %14 : vector<8x64xf32>
    %cst_13 = arith.constant 0.00999999977 : f32
    %16 = vector.broadcast %cst_13 : f32 to vector<8x64xf32>
    %17 = arith.mulf %16, %13 : vector<8x64xf32>
    %18 = arith.select %15, %13, %17 : vector<8x64xi1>, vector<8x64xf32>
    %cst_14 = arith.constant dense<0.000000e+00> : vector<8x64xf32>
    %19 = tpu.matmul %18, %5, %cst_14 {dimension_numbers = #tpu.dot_dimension_numbers<[1], [0], [0], [1], [0, 0, 1, 1], [], []>} : vector<8x64xf32>, vector<64x64xf32>, vector<8x64xf32> -> vector<8x64xf32>
    %20 = vector.broadcast %6 : vector<1x64xf32> to vector<8x64xf32>
    %21 = arith.addf %19, %20 : vector<8x64xf32>
    %cst_15 = arith.constant 0.000000e+00 : f32
    %22 = vector.broadcast %cst_15 : f32 to vector<8x64xf32>
    %23 = arith.cmpf ogt, %21, %22 : vector<8x64xf32>
    %cst_16 = arith.constant 0.00999999977 : f32
    %24 = vector.broadcast %cst_16 : f32 to vector<8x64xf32>
    %25 = arith.mulf %24, %21 : vector<8x64xf32>
    %26 = arith.select %23, %21, %25 : vector<8x64xi1>, vector<8x64xf32>
    %cst_17 = arith.constant dense<0.000000e+00> : vector<8x16xf32>
    %27 = tpu.matmul %26, %7, %cst_17 {dimension_numbers = #tpu.dot_dimension_numbers<[1], [0], [0], [1], [0, 0, 1, 1], [], []>} : vector<8x64xf32>, vector<64x16xf32>, vector<8x16xf32> -> vector<8x16xf32>
    %28 = vector.broadcast %8 : vector<1x16xf32> to vector<8x16xf32>
    %29 = arith.addf %27, %28 : vector<8x16xf32>
    %cst_18 = arith.constant 5.000000e-01 : f32
    %30 = vector.broadcast %cst_18 : f32 to vector<8x16xf32>
    %31 = arith.mulf %29, %30 : vector<8x16xf32>
    %c0_19 = arith.constant 0 : index
    %c0_20 = arith.constant 0 : index
    %32 = vector.load %arg3[%c0_19, %c0_20] : memref<8x16xf32, #tpu.memory_space<vmem>>, vector<8x16xf32>
    tpu.vector_store %arg3[%c0_19, %c0_20], %31 {strides = array<i32>} : memref<8x16xf32, #tpu.memory_space<vmem>>, vector<8x16xf32>,
    return
  }
}

</mosaic_0001>

<llo_original>
// kernel: forward.1
$region0: #{forward.1}
  #allocation0 [shape = 'u32[]', space=smem, size = 0x4, offset = 0x4, fixed_abs, tag = 'smem constant byte address 0x4 - core index']
  #allocation1 [shape = 'u32[144,128]{1,0:T(1,128)}', space=vmem, size = 0x12000, scoped, tag = 'internal scratch']
  %s0 = inlined_call_operand.vmem [shape: f32[8,16], index: 0, kind: input, shape index: {}]
  %s1 = inlined_call_operand.vmem [shape: f32[8,4], index: 1, kind: input, shape index: {}]
  %s2 = inlined_call_operand.hbm [shape: f32[176,128], index: 2, kind: input, shape index: {}]
  %s3 = inlined_call_operand.hbm [shape: f32[8,16], index: 3, kind: output, shape index: {}]
  %s4 = sld [smem:[#allocation0]]
  $region26: #{forward.1} parent=0
    _
  %s6 = ssub.s32 1, %s4
  %s7 = scalar_select 0, %s6, %s4
  $region1: #{forward.1} parent=0
    #allocation2 [shape = 'u8[90112]{0}', space=vmem, size = 0x16000, scoped, tag = 'input window, operand 2, single buffered']
    #allocation3 [shape = 's32[1]{0}', space=sflag, size = 0x4, scoped, tag = 'scoped memory for forward.1']
    #allocation4 [shape = 's32[1]{0}', space=sflag, size = 0x4, scoped, tag = 'scoped memory for forward.1']
    #allocation5 [shape = 'u8[4096]{0}', space=vmem, size = 0x1000, scoped, tag = 'output window, operand 0, single buffered']
    %8 = vsyncpa [#allocation3], 0
    %9 = vsyncpa [#allocation4], 0
    // Predicated region
    $region2: #{forward.1} parent=1 // pred_check
      _
    $region3: #{forward.1} parent=1 // pred_check_branch
      %11 = sbr.rel (0) target = $region5
    $region4: #{forward.1} parent=1 // pred_region
      _
    $region5: #{forward.1} parent=1 // pred_fallthru
      _
    // Predicated region
    $region6: #{forward.1} parent=1 // pred_check
      _
    $region7: #{forward.1} parent=1 // pred_check_branch
      %13 = sbr.rel (0) target = $region9
    $region8: #{forward.1} parent=1 // pred_region
      _
    $region9: #{forward.1} parent=1 // pred_fallthru
      _
    // Predicated region
    $region10: #{forward.1} parent=1 // pred_check
      _
    $region11: #{forward.1} parent=1 // pred_check_branch
      %15 = sbr.rel (0) target = $region13
    $region12: #{forward.1} parent=1 // pred_region
      %s17 = ssub.s32 2816, 2816
      %18 = vsyncadd [#allocation3], %s17
      %s19 = sshll.u32 [#allocation2], 4
      %s20 = int_to_ptr.vmem [resolvable:$true] %s19
      %25 = dma.hbm_to_vmem [thread:$0]  %s2, 2816, %s20, [#allocation3], 128, 128, 8
    $region13: #{forward.1} parent=1 // pred_fallthru
      _
    // Predicated region
    $region14: #{forward.1} parent=1 // pred_check
      _
    $region15: #{forward.1} parent=1 // pred_check_branch
      %27 = sbr.rel (0) target = $region17
    $region16: #{forward.1} parent=1 // pred_region
      %28 = dma.done [#allocation3], 2816
    $region17: #{forward.1} parent=1 // pred_fallthru
      _
    %v29 = vld [vmem:[%s0] sm:$0xff]
    %v30 = vld [vmem:[%s1] sm:$0xff]
    %v31 = vld [vmem:[#allocation2] sm:$0xff]
    %v32 = vld [vmem:[#allocation2 + $0x8] sm:$0xff]
    %v33 = vld [vmem:[#allocation2 + $0x10] sm:$0xf]
    %v34 = vld [vmem:[#allocation2 + $0x18] sm:$0x1]
    %v35 = vld [vmem:[#allocation2 + $0x20] sm:$0xff]
    %v36 = vld [vmem:[#allocation2 + $0x28] sm:$0xff]
    %v37 = vld [vmem:[#allocation2 + $0x30] sm:$0xff]
    %v38 = vld [vmem:[#allocation2 + $0x38] sm:$0xff]
    %v39 = vld [vmem:[#allocation2 + $0x40] sm:$0xff]
    %v40 = vld [vmem:[#allocation2 + $0x48] sm:$0xff]
    %v41 = vld [vmem:[#allocation2 + $0x50] sm:$0xff]
    %v42 = vld [vmem:[#allocation2 + $0x58] sm:$0xff]
    %v43 = vld [vmem:[#allocation2 + $0x60] sm:$0x1]
    %v44 = vld [vmem:[#allocation2 + $0x68] sm:$0xff]
    %v45 = vld [vmem:[#allocation2 + $0x70] sm:$0xff]
    %v46 = vld [vmem:[#allocation2 + $0x78] sm:$0xff]
    %v47 = vld [vmem:[#allocation2 + $0x80] sm:$0xff]
    %v48 = vld [vmem:[#allocation2 + $0x88] sm:$0xff]
    %v49 = vld [vmem:[#allocation2 + $0x90] sm:$0xff]
    %v50 = vld [vmem:[#allocation2 + $0x98] sm:$0xff]
    %v51 = vld [vmem:[#allocation2 + $0xa0] sm:$0xff]
    %v52 = vld [vmem:[#allocation2 + $0xa8] sm:$0x1]
    %vm53 = vcmask 31744
    %v55 = vsel %vm53, %v30, 0
    %vm57 = vcmask 1043456
    %v59 = vsel %vm57, %v33, 0
    %61 = vmatprep.subr.mxu0 0.0
    %62 = vmatpush1.msra.mxu0 %v59
    %63 = vmatprep.subr.mxu0 0.0
    %64 = vmatpush1.msra.mxu0 0.0
    %65 = vmatprep.subr.mxu0 0.0
    %66 = vmatpush1.msra.mxu0 0.0
    %67 = vmatprep.subr.mxu0 0.0
    %68 = vmatpush1.msra.mxu0 0.0
    %69 = vmatprep.subr.mxu0 0.0
    %70 = vmatpush1.msra.mxu0 0.0
    %71 = vmatprep.subr.mxu0 0.0
    %72 = vmatpush1.msra.mxu0 0.0
    %73 = vmatprep.subr.mxu0 0.0
    %74 = vmatpush1.msra.mxu0 0.0
    %75 = vmatprep.subr.mxu0 0.0
    %76 = vmatpush1.msra.mxu0 0.0
    %77 = vmatprep.subr.mxu0 0.0
    %78 = vmatpush1.msra.mxu0 0.0
    %79 = vmatprep.subr.mxu0 0.0
    %80 = vmatpush1.msra.mxu0 0.0
    %81 = vmatprep.subr.mxu0 0.0
    %82 = vmatpush1.msra.mxu0 0.0
    %83 = vmatprep.subr.mxu0 0.0
    %84 = vmatpush1.msra.mxu0 0.0
    %85 = vmatprep.subr.mxu0 0.0
    %86 = vmatpush1.msra.mxu0 0.0
    %87 = vmatprep.subr.mxu0 0.0
    %88 = vmatpush1.msra.mxu0 0.0
    %89 = vmatprep.subr.mxu0 0.0
    %90 = vmatpush1.msra.mxu0 0.0
    %91 = vmatprep.subr.mxu0 0.0
    %92 = vmatpush1.msra.mxu0 0.0
    %93 = vmatprep.subr.mxu0 0.0
    %94 = vmatpush1.msra.mxu0 0.0
    %95 = vmatprep.subr.mxu0 0.0
    %96 = vmatpush1.msra.mxu0 0.0
    %97 = vmatprep.subr.mxu0 0.0
    %98 = vmatpush1.msra.mxu0 0.0
    %99 = vmatprep.subr.mxu0 0.0
    %100 = vmatpush1.msra.mxu0 0.0
    %101 = vmatprep.subr.mxu0 0.0
    %102 = vmatpush1.msra.mxu0 0.0
    %103 = vmatprep.subr.mxu0 0.0
    %104 = vmatpush1.msra.mxu0 0.0
    %105 = vmatprep.subr.mxu0 0.0
    %106 = vmatpush1.msra.mxu0 0.0
    %107 = vmatprep.subr.mxu0 0.0
    %108 = vmatpush1.msra.mxu0 0.0
    %109 = vmatprep.subr.mxu0 0.0
    %110 = vmatpush1.msra.mxu0 0.0
    %111 = vmatprep.subr.mxu0 0.0
    %112 = vmatpush1.msra.mxu0 0.0
    %113 = vmatprep.subr.mxu0 0.0
    %114 = vmatpush1.msra.mxu0 0.0
    %115 = vmatprep.subr.mxu0 0.0
    %116 = vmatpush1.msra.mxu0 0.0
    %117 = vmatprep.subr.mxu0 0.0
    %118 = vmatpush1.msra.mxu0 0.0
    %119 = vmatprep.subr.mxu0 0.0
    %120 = vmatpush1.msra.mxu0 0.0
    %121 = vmatprep.subr.mxu0 0.0
    %122 = vmatpush1.msra.mxu0 0.0
    %123 = vmatprep.subr.mxu0 0.0
    %124 = vmatpush1.msra.mxu0 0.0
    %125 = vmatprep.mubr.f32.mxu0 0.0
    %126 = vmatmul.mubr.f32.gmra.mrb[0].mxu0 %v55
    %v127 = vpop.f32.mrb[0].mxu0
    %v128 = vadd.f32 0.0, %v127
    %v129 = vpop.f32.mrb[0].mxu0
    %130 = vdwg.mxu0
    %vm131 = vcmask 130048
    %v133 = vsel %vm131, %v29, 0
    %135 = vmatprep.subr.mxu0 0.0
    %136 = vmatpush1.msra.mxu0 %v31
    %137 = vmatprep.subr.mxu0 0.0
    %138 = vmatpush1.msra.mxu0 %v32
    %139 = vmatprep.subr.mxu0 0.0
    %140 = vmatpush1.msra.mxu0 0.0
    %141 = vmatprep.subr.mxu0 0.0
    %142 = vmatpush1.msra.mxu0 0.0
    %143 = vmatprep.subr.mxu0 0.0
    %144 = vmatpush1.msra.mxu0 0.0
    %145 = vmatprep.subr.mxu0 0.0
    %146 = vmatpush1.msra.mxu0 0.0
    %147 = vmatprep.subr.mxu0 0.0
    %148 = vmatpush1.msra.mxu0 0.0
    %149 = vmatprep.subr.mxu0 0.0
    %150 = vmatpush1.msra.mxu0 0.0
    %151 = vmatprep.subr.mxu0 0.0
    %152 = vmatpush1.msra.mxu0 0.0
    %153 = vmatprep.subr.mxu0 0.0
    %154 = vmatpush1.msra.mxu0 0.0
    %155 = vmatprep.subr.mxu0 0.0
    %156 = vmatpush1.msra.mxu0 0.0
    %157 = vmatprep.subr.mxu0 0.0
    %158 = vmatpush1.msra.mxu0 0.0
    %159 = vmatprep.subr.mxu0 0.0
    %160 = vmatpush1.msra.mxu0 0.0
    %161 = vmatprep.subr.mxu0 0.0
    %162 = vmatpush1.msra.mxu0 0.0
    %163 = vmatprep.subr.mxu0 0.0
    %164 = vmatpush1.msra.mxu0 0.0
    %165 = vmatprep.subr.mxu0 0.0
    %166 = vmatpush1.msra.mxu0 0.0
    %167 = vmatprep.subr.mxu0 0.0
    %168 = vmatpush1.msra.mxu0 0.0
    %169 = vmatprep.subr.mxu0 0.0
    %170 = vmatpush1.msra.mxu0 0.0
    %171 = vmatprep.subr.mxu0 0.0
    %172 = vmatpush1.msra.mxu0 0.0
    %173 = vmatprep.subr.mxu0 0.0
    %174 = vmatpush1.msra.mxu0 0.0
    %175 = vmatprep.subr.mxu0 0.0
    %176 = vmatpush1.msra.mxu0 0.0
    %177 = vmatprep.subr.mxu0 0.0
    %178 = vmatpush1.msra.mxu0 0.0
    %179 = vmatprep.subr.mxu0 0.0
    %180 = vmatpush1.msra.mxu0 0.0
    %181 = vmatprep.subr.mxu0 0.0
    %182 = vmatpush1.msra.mxu0 0.0
    %183 = vmatprep.subr.mxu0 0.0
    %184 = vmatpush1.msra.mxu0 0.0
    %185 = vmatprep.subr.mxu0 0.0
    %186 = vmatpush1.msra.mxu0 0.0
    %187 = vmatprep.subr.mxu0 0.0
    %188 = vmatpush1.msra.mxu0 0.0
    %189 = vmatprep.subr.mxu0 0.0
    %190 = vmatpush1.msra.mxu0 0.0
    %191 = vmatprep.subr.mxu0 0.0
    %192 = vmatpush1.msra.mxu0 0.0
    %193 = vmatprep.subr.mxu0 0.0
    %194 = vmatpush1.msra.mxu0 0.0
    %195 = vmatprep.subr.mxu0 0.0
    %196 = vmatpush1.msra.mxu0 0.0
    %197 = vmatprep.subr.mxu0 0.0
    %198 = vmatpush1.msra.mxu0 0.0
    %199 = vmatprep.mubr.f32.mxu0 0.0
    %200 = vmatmul.mubr.f32.gmra.mrb[0].mxu0 %v133
    %v201 = vpop.f32.mrb[0].mxu0
    %v202 = vadd.f32 %v128, %v201
    %v203 = vpop.f32.mrb[0].mxu0
    %204 = vdwg.mxu0
    %v205 = vlaneseq
    %v206 = vshrl.u32 %v205, 7
    %v207 = vsub.s32 0, %v206
    %v208 = vrot.slane %v34, %v207
    %v209 = vadd.f32 %v202, %v208
    %vm210 = vcmp.gt.f32.partialorder %v209, 0.0
    %v211 = vmul.f32 %v209, 0.01
    %v212 = vsel %vm210, %v209, %v211
    %v213 = vlaneseq
    %v214 = vshrl.u32 %v213, 7
    %v215 = vsub.s32 0, %v214
    %v216 = vrot.slane %v43, %v215
    %vm217 = vcmask 523264
    %v219 = vsel %vm217, %v212, 0
    %221 = vmatprep.subr.mxu0 0.0
    %222 = vmatpush1.msra.mxu0 %v35
    %223 = vmatprep.subr.mxu0 0.0
    %224 = vmatpush1.msra.mxu0 %v36
    %225 = vmatprep.subr.mxu0 0.0
    %226 = vmatpush1.msra.mxu0 %v37
    %227 = vmatprep.subr.mxu0 0.0
    %228 = vmatpush1.msra.mxu0 %v38
    %229 = vmatprep.subr.mxu0 0.0
    %230 = vmatpush1.msra.mxu0 %v39
    %231 = vmatprep.subr.mxu0 0.0
    %232 = vmatpush1.msra.mxu0 %v40
    %233 = vmatprep.subr.mxu0 0.0
    %234 = vmatpush1.msra.mxu0 %v41
    %235 = vmatprep.subr.mxu0 0.0
    %236 = vmatpush1.msra.mxu0 %v42
    %237 = vmatprep.subr.mxu0 0.0
    %238 = vmatpush1.msra.mxu0 0.0
    %239 = vmatprep.subr.mxu0 0.0
    %240 = vmatpush1.msra.mxu0 0.0
    %241 = vmatprep.subr.mxu0 0.0
    %242 = vmatpush1.msra.mxu0 0.0
    %243 = vmatprep.subr.mxu0 0.0
    %244 = vmatpush1.msra.mxu0 0.0
    %245 = vmatprep.subr.mxu0 0.0
    %246 = vmatpush1.msra.mxu0 0.0
    %247 = vmatprep.subr.mxu0 0.0
    %248 = vmatpush1.msra.mxu0 0.0
    %249 = vmatprep.subr.mxu0 0.0
    %250 = vmatpush1.msra.mxu0 0.0
    %251 = vmatprep.subr.mxu0 0.0
    %252 = vmatpush1.msra.mxu0 0.0
    %253 = vmatprep.subr.mxu0 0.0
    %254 = vmatpush1.msra.mxu0 0.0
    %255 = vmatprep.subr.mxu0 0.0
    %256 = vmatpush1.msra.mxu0 0.0
    %257 = vmatprep.subr.mxu0 0.0
    %258 = vmatpush1.msra.mxu0 0.0
    %259 = vmatprep.subr.mxu0 0.0
    %260 = vmatpush1.msra.mxu0 0.0
    %261 = vmatprep.subr.mxu0 0.0
    %262 = vmatpush1.msra.mxu0 0.0
    %263 = vmatprep.subr.mxu0 0.0
    %264 = vmatpush1.msra.mxu0 0.0
    %265 = vmatprep.subr.mxu0 0.0
    %266 = vmatpush1.msra.mxu0 0.0
    %267 = vmatprep.subr.mxu0 0.0
    %268 = vmatpush1.msra.mxu0 0.0
    %269 = vmatprep.subr.mxu0 0.0
    %270 = vmatpush1.msra.mxu0 0.0
    %271 = vmatprep.subr.mxu0 0.0
    %272 = vmatpush1.msra.mxu0 0.0
    %273 = vmatprep.subr.mxu0 0.0
    %274 = vmatpush1.msra.mxu0 0.0
    %275 = vmatprep.subr.mxu0 0.0
    %276 = vmatpush1.msra.mxu0 0.0
    %277 = vmatprep.subr.mxu0 0.0
    %278 = vmatpush1.msra.mxu0 0.0
    %279 = vmatprep.subr.mxu0 0.0
    %280 = vmatpush1.msra.mxu0 0.0
    %281 = vmatprep.subr.mxu0 0.0
    %282 = vmatpush1.msra.mxu0 0.0
    %283 = vmatprep.subr.mxu0 0.0
    %284 = vmatpush1.msra.mxu0 0.0
    %285 = vmatprep.mubr.f32.mxu0 0.0
    %286 = vmatmul.mubr.f32.gmra.mrb[0].mxu0 %v219
    %v287 = vpop.f32.mrb[0].mxu0
    %v288 = vadd.f32 %v216, %v287
    %v289 = vpop.f32.mrb[0].mxu0
    %290 = vdwg.mxu0
    %vm291 = vcmp.gt.f32.partialorder %v288, 0.0
    %v292 = vmul.f32 %v288, 0.01
    %v293 = vsel %vm291, %v288, %v292
    %v294 = vlaneseq
    %v295 = vshrl.u32 %v294, 7
    %v296 = vsub.s32 0, %v295
    %v297 = vrot.slane %v52, %v296
    %v299 = vsel %vm217, %v293, 0
    %301 = vmatprep.subr.mxu0 0.0
    %302 = vmatpush1.msra.mxu0 %v44
    %303 = vmatprep.subr.mxu0 0.0
    %304 = vmatpush1.msra.mxu0 %v45
    %305 = vmatprep.subr.mxu0 0.0
    %306 = vmatpush1.msra.mxu0 %v46
    %307 = vmatprep.subr.mxu0 0.0
    %308 = vmatpush1.msra.mxu0 %v47
    %309 = vmatprep.subr.mxu0 0.0
    %310 = vmatpush1.msra.mxu0 %v48
    %311 = vmatprep.subr.mxu0 0.0
    %312 = vmatpush1.msra.mxu0 %v49
    %313 = vmatprep.subr.mxu0 0.0
    %314 = vmatpush1.msra.mxu0 %v50
    %315 = vmatprep.subr.mxu0 0.0
    %316 = vmatpush1.msra.mxu0 %v51
    %317 = vmatprep.subr.mxu0 0.0
    %318 = vmatpush1.msra.mxu0 0.0
    %319 = vmatprep.subr.mxu0 0.0
    %320 = vmatpush1.msra.mxu0 0.0
    %321 = vmatprep.subr.mxu0 0.0
    %322 = vmatpush1.msra.mxu0 0.0
    %323 = vmatprep.subr.mxu0 0.0
    %324 = vmatpush1.msra.mxu0 0.0
    %325 = vmatprep.subr.mxu0 0.0
    %326 = vmatpush1.msra.mxu0 0.0
    %327 = vmatprep.subr.mxu0 0.0
    %328 = vmatpush1.msra.mxu0 0.0
    %329 = vmatprep.subr.mxu0 0.0
    %330 = vmatpush1.msra.mxu0 0.0
    %331 = vmatprep.subr.mxu0 0.0
    %332 = vmatpush1.msra.mxu0 0.0
    %333 = vmatprep.subr.mxu0 0.0
    %334 = vmatpush1.msra.mxu0 0.0
    %335 = vmatprep.subr.mxu0 0.0
    %336 = vmatpush1.msra.mxu0 0.0
    %337 = vmatprep.subr.mxu0 0.0
    %338 = vmatpush1.msra.mxu0 0.0
    %339 = vmatprep.subr.mxu0 0.0
    %340 = vmatpush1.msra.mxu0 0.0
    %341 = vmatprep.subr.mxu0 0.0
    %342 = vmatpush1.msra.mxu0 0.0
    %343 = vmatprep.subr.mxu0 0.0
    %344 = vmatpush1.msra.mxu0 0.0
    %345 = vmatprep.subr.mxu0 0.0
    %346 = vmatpush1.msra.mxu0 0.0
    %347 = vmatprep.subr.mxu0 0.0
    %348 = vmatpush1.msra.mxu0 0.0
    %349 = vmatprep.subr.mxu0 0.0
    %350 = vmatpush1.msra.mxu0 0.0
    %351 = vmatprep.subr.mxu0 0.0
    %352 = vmatpush1.msra.mxu0 0.0
    %353 = vmatprep.subr.mxu0 0.0
    %354 = vmatpush1.msra.mxu0 0.0
    %355 = vmatprep.subr.mxu0 0.0
    %356 = vmatpush1.msra.mxu0 0.0
    %357 = vmatprep.subr.mxu0 0.0
    %358 = vmatpush1.msra.mxu0 0.0
    %359 = vmatprep.subr.mxu0 0.0
    %360 = vmatpush1.msra.mxu0 0.0
    %361 = vmatprep.subr.mxu0 0.0
    %362 = vmatpush1.msra.mxu0 0.0
    %363 = vmatprep.subr.mxu0 0.0
    %364 = vmatpush1.msra.mxu0 0.0
    %365 = vmatprep.mubr.f32.mxu0 0.0
    %366 = vmatmul.mubr.f32.gmra.mrb[0].mxu0 %v299
    %v367 = vpop.f32.mrb[0].mxu0
    %v368 = vadd.f32 %v297, %v367
    %v369 = vpop.f32.mrb[0].mxu0
    %370 = vdwg.mxu0
    %v371 = vmul.f32 %v368, 0.5
    %372 = vst.msk [vmem:[#allocation5] sm:$0xff] %vm131, %v371
    // Predicated region
    $region18: #{forward.1} parent=1 // pred_check
      _
    $region19: #{forward.1} parent=1 // pred_check_branch
      %374 = sbr.rel (0) target = $region21
    $region20: #{forward.1} parent=1 // pred_region
      %s376 = ssub.s32 128, 128
      %377 = vsyncadd [#allocation4], %s376
      %s379 = sshll.u32 [#allocation5], 4
      %s380 = int_to_ptr.vmem [resolvable:$true] %s379
      %382 = dma.vmem_to_hbm [thread:$0]  %s380, 128, %s3, [#allocation4]
    $region21: #{forward.1} parent=1 // pred_fallthru
      _
    // Predicated region
    $region22: #{forward.1} parent=1 // pred_check
      _
    $region23: #{forward.1} parent=1 // pred_check_branch
      %384 = sbr.rel (0) target = $region25
    $region24: #{forward.1} parent=1 // pred_region
      %385 = dma.done [#allocation4], 128
    $region25: #{forward.1} parent=1 // pred_fallthru
      _
    %386 = vsyncpa [#allocation3], 1
    %387 = vsyncpa [#allocation4], 1

</llo_original>
